<compile_context>
chip_gen: v5e
topology: v5e:2x2
jax: 0.10.0
libtpu: 0.0.40
codegen_flags: <defaults>
</compile_context>

<pallas_src>
import functools

import jax
import jax.numpy as jnp
from jax.experimental import pallas as pl
from jax.experimental.pallas import tpu as pltpu


def _cdiv(a, b):
    return (a + b - 1) // b


def _vmem_capacity_bytes():
    try:
        return int(pltpu.get_tpu_info().vmem_capacity_bytes)
    except Exception:
        return 64 * 1024 * 1024  # conservative default (v7x per-core VMEM)


def _fold_rows(v):
    """Tree-fold (R, 128) -> (min(R, 8), 128) by summing 8-row chunks.

    R is either <= 8 or 8 * 2^k, so the halving tree is exact; the reshape
    matches the natural (8, 128) tiling (no relayout) and the dependent-add
    chain is log2(R/8) deep instead of R/8.
    """
    r = v.shape[0]
    if r <= 8:
        return v
    a = v.reshape(r // 8, 8, v.shape[1])
    while a.shape[0] > 1:
        half = a.shape[0] // 2
        a = a[:half] + a[half:]
    return a[0]


def _dice_ce_kernel(x_ref, y_ref, out_ref, *,
                    C, hw, rows_tile, num_j, apply_softmax, needs_mask):
    s_id = pl.program_id(1)   # spatial-split index
    j = pl.program_id(2)      # row-tile index within the split

    @pl.when(j == 0)
    def _init():
        out_ref[...] = jnp.zeros_like(out_ref)

    labels = y_ref[...]                                   # (RT, 128) int32

    if needs_mask:
        row_tile_idx = s_id * num_j + j
        base = row_tile_idx * (rows_tile * 128)
        row_i = jax.lax.broadcasted_iota(jnp.int32, (rows_tile, 128), 0)
        lane_i = jax.lax.broadcasted_iota(jnp.int32, (rows_tile, 128), 1)
        valid = (base + row_i * 128 + lane_i) < hw         # (RT, 128) bool
    else:
        valid = None

    # Load & cast one class-slab at a time; the class axis is a leading
    # (non-vreg) dim so all class reductions below are element-wise VALU ops.
    xc = [x_ref[c].astype(jnp.float32) for c in range(C)]

    m = xc[0]
    for c in range(1, C):
        m = jnp.maximum(m, xc[c])

    e = [jnp.exp(xc[c] - m) for c in range(C)]
    denom = e[0]
    for c in range(1, C):
        denom = denom + e[c]

    # one-hot masks and x[label]
    t = [labels == c for c in range(C)]
    x_true = jnp.zeros_like(m)
    for c in range(C):
        x_true = jnp.where(t[c], xc[c], x_true)

    # per-pixel cross entropy: logsumexp(x) - x[label]
    ce = jnp.log(denom) + m - x_true
    if needs_mask:
        ce = jnp.where(valid, ce, 0.0)
    out_ref[3 * C] += _fold_rows(ce)

    if apply_softmax:
        inv = pl.reciprocal(denom, approx=True)            # EUP slot
        inv = inv * (2.0 - denom * inv)                     # one Newton step

    for c in range(C):
        s = e[c] * inv if apply_softmax else xc[c]
        tc = t[c].astype(jnp.float32)
        inter = s * tc
        zz = s * s
        if needs_mask:
            inter = jnp.where(valid, inter, 0.0)
            zz = jnp.where(valid, zz, 0.0)
            tc = jnp.where(valid, tc, 0.0)
        out_ref[c] += _fold_rows(inter)                     # intersect
        out_ref[C + c] += _fold_rows(zz)                    # z_sum
        out_ref[2 * C + c] += _fold_rows(tc)                # y_sum


def dice_ce_loss(y_hat, y, *, num_classes, p, softmax=True, smooth=1e-5):
    """y_hat: (N, C, H, W) float logits; y: (N, H, W) integer labels."""
    N, C, H, W = y_hat.shape
    assert C == num_classes
    HW = H * W
    dtype_bytes = jnp.dtype(y_hat.dtype).itemsize

    # ---- layout: spatial on (sublane, lane); classes on a leading dim ----
    R = _cdiv(HW, 128)
    lane_pad = R * 128 - HW
    x = y_hat.reshape(N, C, HW)
    labels = y.reshape(N, HW).astype(jnp.int32)
    if lane_pad:
        # TODO(synk): flat-layout fallback could avoid this one extra HBM pass
        # when H*W is not a multiple of 128; the padded tail is masked in-kernel.
        x = jnp.pad(x, ((0, 0), (0, 0), (0, lane_pad)))
        labels = jnp.pad(labels, ((0, 0), (0, lane_pad)), constant_values=-1)
    x = x.reshape(N, C, R, 128)          # free, row-major
    labels = labels.reshape(N, R, 128)

    # ---- generation-aware tile: ~1-4 MiB of logits per grid step ----
    vmem_cap = _vmem_capacity_bytes()
    block_bytes_target = max(1 << 20, min(vmem_cap // 24, 4 << 20))
    rows_target = max(8, block_bytes_target // (C * 128 * dtype_bytes))
    if R <= 8:
        rows_tile = R                     # single tiny block (full dim)
    else:
        rows_tile = 8                     # 8 * 2^k, capped by target / 1024 / R
        while rows_tile * 2 <= R and rows_tile * 2 <= min(rows_target, 1024):
            rows_tile *= 2
    num_row_tiles = _cdiv(R, rows_tile)

    # spatial split so both v7x TensorCores get work even when N is small
    nsplit = 2 if (num_row_tiles % 2 == 0) else 1
    num_j = num_row_tiles // nsplit

    needs_mask = (lane_pad != 0) or (R % rows_tile != 0)
    fold_rows = min(8, rows_tile)
    out_rows = 3 * C + 1                  # [intersect[C], z_sum[C], y_sum[C], ce]

    kernel = functools.partial(
        _dice_ce_kernel, C=C, hw=HW, rows_tile=rows_tile, num_j=num_j,
        apply_softmax=bool(softmax), needs_mask=needs_mask)

    vmem_limit = int(max(32 << 20, min(vmem_cap * 3 // 4, 100 << 20)))

    parts = pl.pallas_call(
        kernel,
        out_shape=jax.ShapeDtypeStruct((N * nsplit, out_rows, fold_rows, 128),
                                       jnp.float32),
        grid_spec=pltpu.PrefetchScalarGridSpec(
            num_scalar_prefetch=0,
            grid=(N, nsplit, num_j),
            in_specs=[
                # logits tile: (C, rows_tile, 128), batch dim squeezed
                pl.BlockSpec((pl.Squeezed(), C, rows_tile, 128),
                             lambda n, s, j: (n, 0, s * num_j + j, 0)),
                # labels tile: (rows_tile, 128)
                pl.BlockSpec((pl.Squeezed(), rows_tile, 128),
                             lambda n, s, j: (n, s * num_j + j, 0)),
            ],
            # resident per-(n, split) partial-sum block (accumulated across j)
            out_specs=pl.BlockSpec((pl.Squeezed(), out_rows, fold_rows, 128),
                                   lambda n, s, j: (n * nsplit + s, 0, 0, 0)),
        ),
        compiler_params=pltpu.CompilerParams(
            dimension_semantics=("parallel", "parallel", "arbitrary"),
            vmem_limit_bytes=vmem_limit,
        ),
    )(x, labels)

    # tiny combine / finalize in plain JAX
    sums = parts.sum(axis=(0, 2, 3))                       # (3C+1,)
    inter = sums[:C]
    z_sum = sums[C:2 * C]
    y_sum = sums[2 * C:3 * C]
    ce_sum = sums[3 * C]

    dice_per_class = 1.0 - (2.0 * inter + smooth) / (z_sum + y_sum + smooth)
    dice_loss = jnp.sum(dice_per_class) / num_classes      # weight = [1]*C
    ce_loss = ce_sum / (N * H * W)                         # CrossEntropyLoss(mean)
    return ce_loss * p + dice_loss * (1.0 - p)


def _reference_dice_ce(y_hat, y, *, num_classes, p, softmax=True):
    """Pure-JAX reference mirroring the PyTorch module."""
    logits = y_hat.astype(jnp.float32)
    onehot = jax.nn.one_hot(y, num_classes, axis=1, dtype=jnp.float32)
    logp = jax.nn.log_softmax(logits, axis=1)
    ce = -jnp.mean(jnp.sum(onehot * logp, axis=1))
    s = jax.nn.softmax(logits, axis=1) if softmax else logits
    smooth = 1e-5
    loss = 0.0
    for i in range(num_classes):
        si, ti = s[:, i], onehot[:, i]
        inter = jnp.sum(si * ti)
        y_sum = jnp.sum(ti * ti)
        z_sum = jnp.sum(si * si)
        loss += 1.0 - (2.0 * inter + smooth) / (z_sum + y_sum + smooth)
    dice = loss / num_classes
    return ce * p + dice * (1.0 - p)


if __name__ == "__main__":
    key = jax.random.PRNGKey(0)
    k1, k2, k3, k4, k5, k6 = jax.random.split(key, 6)
    TOL = dict(rtol=1e-4, atol=1e-4)

    # test 1: 128-divisible spatial extent, softmax path
    N, C, H, W = 2, 4, 16, 16
    y_hat = jax.random.normal(k1, (N, C, H, W), dtype=jnp.float32)
    y = jax.random.randint(k2, (N, H, W), 0, C, dtype=jnp.int32)
    out = jax.block_until_ready(
        dice_ce_loss(y_hat, y, num_classes=C, p=0.5, softmax=True))
    ref = _reference_dice_ce(y_hat, y, num_classes=C, p=0.5, softmax=True)
    assert jnp.allclose(out, ref, **TOL), (out, ref)

    # test 2: non-128-divisible spatial extent -> lane pad + in-kernel mask
    N2, C2, H2, W2 = 2, 3, 7, 9
    y_hat2 = jax.random.normal(k3, (N2, C2, H2, W2), dtype=jnp.float32)
    y2 = jax.random.randint(k4, (N2, H2, W2), 0, C2, dtype=jnp.int32)
    out2 = jax.block_until_ready(
        dice_ce_loss(y_hat2, y2, num_classes=C2, p=0.3, softmax=True))
    ref2 = _reference_dice_ce(y_hat2, y2, num_classes=C2, p=0.3, softmax=True)
    assert jnp.allclose(out2, ref2, **TOL), (out2, ref2)

    # test 3: softmax=False dice path
    out3 = jax.block_until_ready(
        dice_ce_loss(y_hat, y, num_classes=C, p=0.7, softmax=False))
    ref3 = _reference_dice_ce(y_hat, y, num_classes=C, p=0.7, softmax=False)
    assert jnp.allclose(out3, ref3, **TOL), (out3, ref3)

    # test 4: partial last row-tile + spatial split across two grid slabs
    N4, C4, H4, W4 = 2, 4, 80, 80
    y_hat4 = jax.random.normal(k5, (N4, C4, H4, W4), dtype=jnp.float32)
    y4 = jax.random.randint(k6, (N4, H4, W4), 0, C4, dtype=jnp.int32)
    out4 = jax.block_until_ready(
        dice_ce_loss(y_hat4, y4, num_classes=C4, p=0.5, softmax=True))
    ref4 = _reference_dice_ce(y_hat4, y4, num_classes=C4, p=0.5, softmax=True)
    assert jnp.allclose(out4, ref4, **TOL), (out4, ref4)

    print("KERNEL_OK")
</pallas_src>

<mosaic_0001>
module attributes {stable_mosaic.version = 11 : i64} {
  func.func @_dice_ce_kernel(%arg0: i32, %arg1: i32, %arg2: i32, %arg3: memref<1x4x2x128xf32, #tpu.memory_space<vmem>>, %arg4: memref<1x2x128xi32, #tpu.memory_space<vmem>>, %arg5: memref<1x13x2x128xf32, #tpu.memory_space<vmem>>) attributes {dimension_semantics = [#tpu.dimension_semantics<parallel>, #tpu.dimension_semantics<parallel>, #tpu.dimension_semantics<arbitrary>], iteration_bounds = array<i64: 2, 1, 1>, scalar_prefetch = 0 : i64, scratch_operands = 0 : i64, tpu.core_type = #tpu.core_type<tc>, window_params = [{transform_indices = @transform_0, window_bounds = array<i64: 1, 4, 2, 128>}, {transform_indices = @transform_1, window_bounds = array<i64: 1, 2, 128>}, {transform_indices = @transform_2, window_bounds = array<i64: 1, 13, 2, 128>}]} {
    %c0_i32 = arith.constant 0 : i32
    %0 = arith.cmpi eq, %arg2, %c0_i32 : i32
    %1 = arith.extui %0 : i1 to i32
    %c0_i32_0 = arith.constant 0 : i32
    %2 = arith.cmpi ne, %1, %c0_i32_0 : i32
    scf.if %2 {
      %cst_113 = arith.constant 0.000000e+00 : f32
      %146 = vector.broadcast %cst_113 : f32 to vector<13x2x128xf32>
      %c0_114 = arith.constant 0 : index
      %c0_115 = arith.constant 0 : index
      %c0_116 = arith.constant 0 : index
      %c0_117 = arith.constant 0 : index
      %147 = vector.load %arg5[%c0_114, %c0_115, %c0_116, %c0_117] : memref<1x13x2x128xf32, #tpu.memory_space<vmem>>, vector<1x13x2x128xf32>
      %148 = vector.shape_cast %147 : vector<1x13x2x128xf32> to vector<13x2x128xf32>
      %149 = vector.shape_cast %146 : vector<13x2x128xf32> to vector<1x13x2x128xf32>
      tpu.vector_store %arg5[%c0_114, %c0_115, %c0_116, %c0_117], %149 {strides = array<i32>} : memref<1x13x2x128xf32, #tpu.memory_space<vmem>>, vector<1x13x2x128xf32>,
    } else {
    }
    %c0 = arith.constant 0 : index
    %c0_1 = arith.constant 0 : index
    %c0_2 = arith.constant 0 : index
    %3 = vector.load %arg4[%c0, %c0_1, %c0_2] : memref<1x2x128xi32, #tpu.memory_space<vmem>>, vector<1x2x128xi32>
    %4 = vector.shape_cast %3 : vector<1x2x128xi32> to vector<2x128xi32>
    %c0_3 = arith.constant 0 : index
    %c0_4 = arith.constant 0 : index
    %c0_5 = arith.constant 0 : index
    %c0_6 = arith.constant 0 : index
    %5 = vector.load %arg3[%c0_3, %c0_4, %c0_5, %c0_6] : memref<1x4x2x128xf32, #tpu.memory_space<vmem>>, vector<1x1x2x128xf32>
    %6 = vector.shape_cast %5 : vector<1x1x2x128xf32> to vector<2x128xf32>
    %c0_7 = arith.constant 0 : index
    %c1 = arith.constant 1 : index
    %c0_8 = arith.constant 0 : index
    %c0_9 = arith.constant 0 : index
    %7 = vector.load %arg3[%c0_7, %c1, %c0_8, %c0_9] : memref<1x4x2x128xf32, #tpu.memory_space<vmem>>, vector<1x1x2x128xf32>
    %8 = vector.shape_cast %7 : vector<1x1x2x128xf32> to vector<2x128xf32>
    %c0_10 = arith.constant 0 : index
    %c2 = arith.constant 2 : index
    %c0_11 = arith.constant 0 : index
    %c0_12 = arith.constant 0 : index
    %9 = vector.load %arg3[%c0_10, %c2, %c0_11, %c0_12] : memref<1x4x2x128xf32, #tpu.memory_space<vmem>>, vector<1x1x2x128xf32>
    %10 = vector.shape_cast %9 : vector<1x1x2x128xf32> to vector<2x128xf32>
    %c0_13 = arith.constant 0 : index
    %c3 = arith.constant 3 : index
    %c0_14 = arith.constant 0 : index
    %c0_15 = arith.constant 0 : index
    %11 = vector.load %arg3[%c0_13, %c3, %c0_14, %c0_15] : memref<1x4x2x128xf32, #tpu.memory_space<vmem>>, vector<1x1x2x128xf32>
    %12 = vector.shape_cast %11 : vector<1x1x2x128xf32> to vector<2x128xf32>
    %13 = arith.maximumf %6, %8 : vector<2x128xf32>
    %14 = arith.maximumf %13, %10 : vector<2x128xf32>
    %15 = arith.maximumf %14, %12 : vector<2x128xf32>
    %16 = arith.subf %6, %15 : vector<2x128xf32>
    %17 = math.exp %16 : vector<2x128xf32>
    %18 = arith.subf %8, %15 : vector<2x128xf32>
    %19 = math.exp %18 : vector<2x128xf32>
    %20 = arith.subf %10, %15 : vector<2x128xf32>
    %21 = math.exp %20 : vector<2x128xf32>
    %22 = arith.subf %12, %15 : vector<2x128xf32>
    %23 = math.exp %22 : vector<2x128xf32>
    %24 = arith.addf %17, %19 : vector<2x128xf32>
    %25 = arith.addf %24, %21 : vector<2x128xf32>
    %26 = arith.addf %25, %23 : vector<2x128xf32>
    %c0_i32_16 = arith.constant 0 : i32
    %27 = vector.broadcast %c0_i32_16 : i32 to vector<2x128xi32>
    %28 = arith.cmpi eq, %4, %27 : vector<2x128xi32>
    %c1_i32 = arith.constant 1 : i32
    %29 = vector.broadcast %c1_i32 : i32 to vector<2x128xi32>
    %30 = arith.cmpi eq, %4, %29 : vector<2x128xi32>
    %c2_i32 = arith.constant 2 : i32
    %31 = vector.broadcast %c2_i32 : i32 to vector<2x128xi32>
    %32 = arith.cmpi eq, %4, %31 : vector<2x128xi32>
    %c3_i32 = arith.constant 3 : i32
    %33 = vector.broadcast %c3_i32 : i32 to vector<2x128xi32>
    %34 = arith.cmpi eq, %4, %33 : vector<2x128xi32>
    %cst = arith.constant 0.000000e+00 : f32
    %35 = vector.broadcast %cst : f32 to vector<2x128xf32>
    %36 = arith.select %28, %6, %35 : vector<2x128xi1>, vector<2x128xf32>
    %37 = arith.select %30, %8, %36 : vector<2x128xi1>, vector<2x128xf32>
    %38 = arith.select %32, %10, %37 : vector<2x128xi1>, vector<2x128xf32>
    %39 = arith.select %34, %12, %38 : vector<2x128xi1>, vector<2x128xf32>
    %40 = math.log %26 : vector<2x128xf32>
    %41 = arith.addf %40, %15 : vector<2x128xf32>
    %42 = arith.subf %41, %39 : vector<2x128xf32>
    %c0_17 = arith.constant 0 : index
    %c12 = arith.constant 12 : index
    %c0_18 = arith.constant 0 : index
    %c0_19 = arith.constant 0 : index
    %43 = vector.load %arg5[%c0_17, %c12, %c0_18, %c0_19] : memref<1x13x2x128xf32, #tpu.memory_space<vmem>>, vector<1x1x2x128xf32>
    %44 = vector.shape_cast %43 : vector<1x1x2x128xf32> to vector<2x128xf32>
    %45 = arith.addf %44, %42 : vector<2x128xf32>
    %c0_20 = arith.constant 0 : index
    %c12_21 = arith.constant 12 : index
    %c0_22 = arith.constant 0 : index
    %c0_23 = arith.constant 0 : index
    %46 = vector.load %arg5[%c0_20, %c12_21, %c0_22, %c0_23] : memref<1x13x2x128xf32, #tpu.memory_space<vmem>>, vector<1x1x2x128xf32>
    %47 = vector.shape_cast %46 : vector<1x1x2x128xf32> to vector<2x128xf32>
    %48 = vector.shape_cast %45 : vector<2x128xf32> to vector<1x1x2x128xf32>
    tpu.vector_store %arg5[%c0_20, %c12_21, %c0_22, %c0_23], %48 {strides = array<i32>} : memref<1x13x2x128xf32, #tpu.memory_space<vmem>>, vector<1x1x2x128xf32>,
    %49 = tpu.reciprocal %26 {approx = true} : vector<2x128xf32> -> vector<2x128xf32>
    %50 = arith.mulf %26, %49 : vector<2x128xf32>
    %cst_24 = arith.constant 2.000000e+00 : f32
    %51 = vector.broadcast %cst_24 : f32 to vector<2x128xf32>
    %52 = arith.subf %51, %50 : vector<2x128xf32>
    %53 = arith.mulf %49, %52 : vector<2x128xf32>
    %54 = arith.mulf %17, %53 : vector<2x128xf32>
    %55 = arith.extui %28 : vector<2x128xi1> to vector<2x128xi32>
    %56 = arith.sitofp %55 : vector<2x128xi32> to vector<2x128xf32>
    %57 = arith.mulf %54, %56 : vector<2x128xf32>
    %58 = arith.mulf %54, %54 : vector<2x128xf32>
    %c0_25 = arith.constant 0 : index
    %c0_26 = arith.constant 0 : index
    %c0_27 = arith.constant 0 : index
    %c0_28 = arith.constant 0 : index
    %59 = vector.load %arg5[%c0_25, %c0_26, %c0_27, %c0_28] : memref<1x13x2x128xf32, #tpu.memory_space<vmem>>, vector<1x1x2x128xf32>
    %60 = vector.shape_cast %59 : vector<1x1x2x128xf32> to vector<2x128xf32>
    %61 = arith.addf %60, %57 : vector<2x128xf32>
    %c0_29 = arith.constant 0 : index
    %c0_30 = arith.constant 0 : index
    %c0_31 = arith.constant 0 : index
    %c0_32 = arith.constant 0 : index
    %62 = vector.load %arg5[%c0_29, %c0_30, %c0_31, %c0_32] : memref<1x13x2x128xf32, #tpu.memory_space<vmem>>, vector<1x1x2x128xf32>
    %63 = vector.shape_cast %62 : vector<1x1x2x128xf32> to vector<2x128xf32>
    %64 = vector.shape_cast %61 : vector<2x128xf32> to vector<1x1x2x128xf32>
    tpu.vector_store %arg5[%c0_29, %c0_30, %c0_31, %c0_32], %64 {strides = array<i32>} : memref<1x13x2x128xf32, #tpu.memory_space<vmem>>, vector<1x1x2x128xf32>,
    %c0_33 = arith.constant 0 : index
    %c4 = arith.constant 4 : index
    %c0_34 = arith.constant 0 : index
    %c0_35 = arith.constant 0 : index
    %65 = vector.load %arg5[%c0_33, %c4, %c0_34, %c0_35] : memref<1x13x2x128xf32, #tpu.memory_space<vmem>>, vector<1x1x2x128xf32>
    %66 = vector.shape_cast %65 : vector<1x1x2x128xf32> to vector<2x128xf32>
    %67 = arith.addf %66, %58 : vector<2x128xf32>
    %c0_36 = arith.constant 0 : index
    %c4_37 = arith.constant 4 : index
    %c0_38 = arith.constant 0 : index
    %c0_39 = arith.constant 0 : index
    %68 = vector.load %arg5[%c0_36, %c4_37, %c0_38, %c0_39] : memref<1x13x2x128xf32, #tpu.memory_space<vmem>>, vector<1x1x2x128xf32>
    %69 = vector.shape_cast %68 : vector<1x1x2x128xf32> to vector<2x128xf32>
    %70 = vector.shape_cast %67 : vector<2x128xf32> to vector<1x1x2x128xf32>
    tpu.vector_store %arg5[%c0_36, %c4_37, %c0_38, %c0_39], %70 {strides = array<i32>} : memref<1x13x2x128xf32, #tpu.memory_space<vmem>>, vector<1x1x2x128xf32>,
    %c0_40 = arith.constant 0 : index
    %c8 = arith.constant 8 : index
    %c0_41 = arith.constant 0 : index
    %c0_42 = arith.constant 0 : index
    %71 = vector.load %arg5[%c0_40, %c8, %c0_41, %c0_42] : memref<1x13x2x128xf32, #tpu.memory_space<vmem>>, vector<1x1x2x128xf32>
    %72 = vector.shape_cast %71 : vector<1x1x2x128xf32> to vector<2x128xf32>
    %73 = arith.addf %72, %56 : vector<2x128xf32>
    %c0_43 = arith.constant 0 : index
    %c8_44 = arith.constant 8 : index
    %c0_45 = arith.constant 0 : index
    %c0_46 = arith.constant 0 : index
    %74 = vector.load %arg5[%c0_43, %c8_44, %c0_45, %c0_46] : memref<1x13x2x128xf32, #tpu.memory_space<vmem>>, vector<1x1x2x128xf32>
    %75 = vector.shape_cast %74 : vector<1x1x2x128xf32> to vector<2x128xf32>
    %76 = vector.shape_cast %73 : vector<2x128xf32> to vector<1x1x2x128xf32>
    tpu.vector_store %arg5[%c0_43, %c8_44, %c0_45, %c0_46], %76 {strides = array<i32>} : memref<1x13x2x128xf32, #tpu.memory_space<vmem>>, vector<1x1x2x128xf32>,
    %77 = arith.mulf %19, %53 : vector<2x128xf32>
    %78 = arith.extui %30 : vector<2x128xi1> to vector<2x128xi32>
    %79 = arith.sitofp %78 : vector<2x128xi32> to vector<2x128xf32>
    %80 = arith.mulf %77, %79 : vector<2x128xf32>
    %81 = arith.mulf %77, %77 : vector<2x128xf32>
    %c0_47 = arith.constant 0 : index
    %c1_48 = arith.constant 1 : index
    %c0_49 = arith.constant 0 : index
    %c0_50 = arith.constant 0 : index
    %82 = vector.load %arg5[%c0_47, %c1_48, %c0_49, %c0_50] : memref<1x13x2x128xf32, #tpu.memory_space<vmem>>, vector<1x1x2x128xf32>
    %83 = vector.shape_cast %82 : vector<1x1x2x128xf32> to vector<2x128xf32>
    %84 = arith.addf %83, %80 : vector<2x128xf32>
    %c0_51 = arith.constant 0 : index
    %c1_52 = arith.constant 1 : index
    %c0_53 = arith.constant 0 : index
    %c0_54 = arith.constant 0 : index
    %85 = vector.load %arg5[%c0_51, %c1_52, %c0_53, %c0_54] : memref<1x13x2x128xf32, #tpu.memory_space<vmem>>, vector<1x1x2x128xf32>
    %86 = vector.shape_cast %85 : vector<1x1x2x128xf32> to vector<2x128xf32>
    %87 = vector.shape_cast %84 : vector<2x128xf32> to vector<1x1x2x128xf32>
    tpu.vector_store %arg5[%c0_51, %c1_52, %c0_53, %c0_54], %87 {strides = array<i32>} : memref<1x13x2x128xf32, #tpu.memory_space<vmem>>, vector<1x1x2x128xf32>,
    %c0_55 = arith.constant 0 : index
    %c5 = arith.constant 5 : index
    %c0_56 = arith.constant 0 : index
    %c0_57 = arith.constant 0 : index
    %88 = vector.load %arg5[%c0_55, %c5, %c0_56, %c0_57] : memref<1x13x2x128xf32, #tpu.memory_space<vmem>>, vector<1x1x2x128xf32>
    %89 = vector.shape_cast %88 : vector<1x1x2x128xf32> to vector<2x128xf32>
    %90 = arith.addf %89, %81 : vector<2x128xf32>
    %c0_58 = arith.constant 0 : index
    %c5_59 = arith.constant 5 : index
    %c0_60 = arith.constant 0 : index
    %c0_61 = arith.constant 0 : index
    %91 = vector.load %arg5[%c0_58, %c5_59, %c0_60, %c0_61] : memref<1x13x2x128xf32, #tpu.memory_space<vmem>>, vector<1x1x2x128xf32>
    %92 = vector.shape_cast %91 : vector<1x1x2x128xf32> to vector<2x128xf32>
    %93 = vector.shape_cast %90 : vector<2x128xf32> to vector<1x1x2x128xf32>
    tpu.vector_store %arg5[%c0_58, %c5_59, %c0_60, %c0_61], %93 {strides = array<i32>} : memref<1x13x2x128xf32, #tpu.memory_space<vmem>>, vector<1x1x2x128xf32>,
    %c0_62 = arith.constant 0 : index
    %c9 = arith.constant 9 : index
    %c0_63 = arith.constant 0 : index
    %c0_64 = arith.constant 0 : index
    %94 = vector.load %arg5[%c0_62, %c9, %c0_63, %c0_64] : memref<1x13x2x128xf32, #tpu.memory_space<vmem>>, vector<1x1x2x128xf32>
    %95 = vector.shape_cast %94 : vector<1x1x2x128xf32> to vector<2x128xf32>
    %96 = arith.addf %95, %79 : vector<2x128xf32>
    %c0_65 = arith.constant 0 : index
    %c9_66 = arith.constant 9 : index
    %c0_67 = arith.constant 0 : index
    %c0_68 = arith.constant 0 : index
    %97 = vector.load %arg5[%c0_65, %c9_66, %c0_67, %c0_68] : memref<1x13x2x128xf32, #tpu.memory_space<vmem>>, vector<1x1x2x128xf32>
    %98 = vector.shape_cast %97 : vector<1x1x2x128xf32> to vector<2x128xf32>
    %99 = vector.shape_cast %96 : vector<2x128xf32> to vector<1x1x2x128xf32>
    tpu.vector_store %arg5[%c0_65, %c9_66, %c0_67, %c0_68], %99 {strides = array<i32>} : memref<1x13x2x128xf32, #tpu.memory_space<vmem>>, vector<1x1x2x128xf32>,
    %100 = arith.mulf %21, %53 : vector<2x128xf32>
    %101 = arith.extui %32 : vector<2x128xi1> to vector<2x128xi32>
    %102 = arith.sitofp %101 : vector<2x128xi32> to vector<2x128xf32>
    %103 = arith.mulf %100, %102 : vector<2x128xf32>
    %104 = arith.mulf %100, %100 : vector<2x128xf32>
    %c0_69 = arith.constant 0 : index
    %c2_70 = arith.constant 2 : index
    %c0_71 = arith.constant 0 : index
    %c0_72 = arith.constant 0 : index
    %105 = vector.load %arg5[%c0_69, %c2_70, %c0_71, %c0_72] : memref<1x13x2x128xf32, #tpu.memory_space<vmem>>, vector<1x1x2x128xf32>
    %106 = vector.shape_cast %105 : vector<1x1x2x128xf32> to vector<2x128xf32>
    %107 = arith.addf %106, %103 : vector<2x128xf32>
    %c0_73 = arith.constant 0 : index
    %c2_74 = arith.constant 2 : index
    %c0_75 = arith.constant 0 : index
    %c0_76 = arith.constant 0 : index
    %108 = vector.load %arg5[%c0_73, %c2_74, %c0_75, %c0_76] : memref<1x13x2x128xf32, #tpu.memory_space<vmem>>, vector<1x1x2x128xf32>
    %109 = vector.shape_cast %108 : vector<1x1x2x128xf32> to vector<2x128xf32>
    %110 = vector.shape_cast %107 : vector<2x128xf32> to vector<1x1x2x128xf32>
    tpu.vector_store %arg5[%c0_73, %c2_74, %c0_75, %c0_76], %110 {strides = array<i32>} : memref<1x13x2x128xf32, #tpu.memory_space<vmem>>, vector<1x1x2x128xf32>,
    %c0_77 = arith.constant 0 : index
    %c6 = arith.constant 6 : index
    %c0_78 = arith.constant 0 : index
    %c0_79 = arith.constant 0 : index
    %111 = vector.load %arg5[%c0_77, %c6, %c0_78, %c0_79] : memref<1x13x2x128xf32, #tpu.memory_space<vmem>>, vector<1x1x2x128xf32>
    %112 = vector.shape_cast %111 : vector<1x1x2x128xf32> to vector<2x128xf32>
    %113 = arith.addf %112, %104 : vector<2x128xf32>
    %c0_80 = arith.constant 0 : index
    %c6_81 = arith.constant 6 : index
    %c0_82 = arith.constant 0 : index
    %c0_83 = arith.constant 0 : index
    %114 = vector.load %arg5[%c0_80, %c6_81, %c0_82, %c0_83] : memref<1x13x2x128xf32, #tpu.memory_space<vmem>>, vector<1x1x2x128xf32>
    %115 = vector.shape_cast %114 : vector<1x1x2x128xf32> to vector<2x128xf32>
    %116 = vector.shape_cast %113 : vector<2x128xf32> to vector<1x1x2x128xf32>
    tpu.vector_store %arg5[%c0_80, %c6_81, %c0_82, %c0_83], %116 {strides = array<i32>} : memref<1x13x2x128xf32, #tpu.memory_space<vmem>>, vector<1x1x2x128xf32>,
    %c0_84 = arith.constant 0 : index
    %c10 = arith.constant 10 : index
    %c0_85 = arith.constant 0 : index
    %c0_86 = arith.constant 0 : index
    %117 = vector.load %arg5[%c0_84, %c10, %c0_85, %c0_86] : memref<1x13x2x128xf32, #tpu.memory_space<vmem>>, vector<1x1x2x128xf32>
    %118 = vector.shape_cast %117 : vector<1x1x2x128xf32> to vector<2x128xf32>
    %119 = arith.addf %118, %102 : vector<2x128xf32>
    %c0_87 = arith.constant 0 : index
    %c10_88 = arith.constant 10 : index
    %c0_89 = arith.constant 0 : index
    %c0_90 = arith.constant 0 : index
    %120 = vector.load %arg5[%c0_87, %c10_88, %c0_89, %c0_90] : memref<1x13x2x128xf32, #tpu.memory_space<vmem>>, vector<1x1x2x128xf32>
    %121 = vector.shape_cast %120 : vector<1x1x2x128xf32> to vector<2x128xf32>
    %122 = vector.shape_cast %119 : vector<2x128xf32> to vector<1x1x2x128xf32>
    tpu.vector_store %arg5[%c0_87, %c10_88, %c0_89, %c0_90], %122 {strides = array<i32>} : memref<1x13x2x128xf32, #tpu.memory_space<vmem>>, vector<1x1x2x128xf32>,
    %123 = arith.mulf %23, %53 : vector<2x128xf32>
    %124 = arith.extui %34 : vector<2x128xi1> to vector<2x128xi32>
    %125 = arith.sitofp %124 : vector<2x128xi32> to vector<2x128xf32>
    %126 = arith.mulf %123, %125 : vector<2x128xf32>
    %127 = arith.mulf %123, %123 : vector<2x128xf32>
    %c0_91 = arith.constant 0 : index
    %c3_92 = arith.constant 3 : index
    %c0_93 = arith.constant 0 : index
    %c0_94 = arith.constant 0 : index
    %128 = vector.load %arg5[%c0_91, %c3_92, %c0_93, %c0_94] : memref<1x13x2x128xf32, #tpu.memory_space<vmem>>, vector<1x1x2x128xf32>
    %129 = vector.shape_cast %128 : vector<1x1x2x128xf32> to vector<2x128xf32>
    %130 = arith.addf %129, %126 : vector<2x128xf32>
    %c0_95 = arith.constant 0 : index
    %c3_96 = arith.constant 3 : index
    %c0_97 = arith.constant 0 : index
    %c0_98 = arith.constant 0 : index
    %131 = vector.load %arg5[%c0_95, %c3_96, %c0_97, %c0_98] : memref<1x13x2x128xf32, #tpu.memory_space<vmem>>, vector<1x1x2x128xf32>
    %132 = vector.shape_cast %131 : vector<1x1x2x128xf32> to vector<2x128xf32>
    %133 = vector.shape_cast %130 : vector<2x128xf32> to vector<1x1x2x128xf32>
    tpu.vector_store %arg5[%c0_95, %c3_96, %c0_97, %c0_98], %133 {strides = array<i32>} : memref<1x13x2x128xf32, #tpu.memory_space<vmem>>, vector<1x1x2x128xf32>,
    %c0_99 = arith.constant 0 : index
    %c7 = arith.constant 7 : index
    %c0_100 = arith.constant 0 : index
    %c0_101 = arith.constant 0 : index
    %134 = vector.load %arg5[%c0_99, %c7, %c0_100, %c0_101] : memref<1x13x2x128xf32, #tpu.memory_space<vmem>>, vector<1x1x2x128xf32>
    %135 = vector.shape_cast %134 : vector<1x1x2x128xf32> to vector<2x128xf32>
    %136 = arith.addf %135, %127 : vector<2x128xf32>
    %c0_102 = arith.constant 0 : index
    %c7_103 = arith.constant 7 : index
    %c0_104 = arith.constant 0 : index
    %c0_105 = arith.constant 0 : index
    %137 = vector.load %arg5[%c0_102, %c7_103, %c0_104, %c0_105] : memref<1x13x2x128xf32, #tpu.memory_space<vmem>>, vector<1x1x2x128xf32>
    %138 = vector.shape_cast %137 : vector<1x1x2x128xf32> to vector<2x128xf32>
    %139 = vector.shape_cast %136 : vector<2x128xf32> to vector<1x1x2x128xf32>
    tpu.vector_store %arg5[%c0_102, %c7_103, %c0_104, %c0_105], %139 {strides = array<i32>} : memref<1x13x2x128xf32, #tpu.memory_space<vmem>>, vector<1x1x2x128xf32>,
    %c0_106 = arith.constant 0 : index
    %c11 = arith.constant 11 : index
    %c0_107 = arith.constant 0 : index
    %c0_108 = arith.constant 0 : index
    %140 = vector.load %arg5[%c0_106, %c11, %c0_107, %c0_108] : memref<1x13x2x128xf32, #tpu.memory_space<vmem>>, vector<1x1x2x128xf32>
    %141 = vector.shape_cast %140 : vector<1x1x2x128xf32> to vector<2x128xf32>
    %142 = arith.addf %141, %125 : vector<2x128xf32>
    %c0_109 = arith.constant 0 : index
    %c11_110 = arith.constant 11 : index
    %c0_111 = arith.constant 0 : index
    %c0_112 = arith.constant 0 : index
    %143 = vector.load %arg5[%c0_109, %c11_110, %c0_111, %c0_112] : memref<1x13x2x128xf32, #tpu.memory_space<vmem>>, vector<1x1x2x128xf32>
    %144 = vector.shape_cast %143 : vector<1x1x2x128xf32> to vector<2x128xf32>
    %145 = vector.shape_cast %142 : vector<2x128xf32> to vector<1x1x2x128xf32>
    tpu.vector_store %arg5[%c0_109, %c11_110, %c0_111, %c0_112], %145 {strides = array<i32>} : memref<1x13x2x128xf32, #tpu.memory_space<vmem>>, vector<1x1x2x128xf32>,
    return
  }
  func.func @transform_0(%arg0: i32, %arg1: i32, %arg2: i32) -> (i32, i32, i32, i32) {
    %c1_i32 = arith.constant 1 : i32
    %0 = arith.muli %arg1, %c1_i32 : i32
    %1 = arith.addi %0, %arg2 : i32
    %c0_i32 = arith.constant 0 : i32
    %c0_i32_0 = arith.constant 0 : i32
    %c0_i32_1 = arith.constant 0 : i32
    return %arg0, %c0_i32, %1, %c0_i32_0 : i32, i32, i32, i32
  }
  func.func @transform_1(%arg0: i32, %arg1: i32, %arg2: i32) -> (i32, i32, i32) {
    %c1_i32 = arith.constant 1 : i32
    %0 = arith.muli %arg1, %c1_i32 : i32
    %1 = arith.addi %0, %arg2 : i32
    %c0_i32 = arith.constant 0 : i32
    %c0_i32_0 = arith.constant 0 : i32
    return %arg0, %1, %c0_i32 : i32, i32, i32
  }
  func.func @transform_2(%arg0: i32, %arg1: i32, %arg2: i32) -> (i32, i32, i32, i32) {
    %c1_i32 = arith.constant 1 : i32
    %0 = arith.muli %arg0, %c1_i32 : i32
    %1 = arith.addi %0, %arg1 : i32
    %c0_i32 = arith.constant 0 : i32
    %c0_i32_0 = arith.constant 0 : i32
    %c0_i32_1 = arith.constant 0 : i32
    %c0_i32_2 = arith.constant 0 : i32
    return %1, %c0_i32, %c0_i32_0, %c0_i32_1 : i32, i32, i32, i32
  }
}

</mosaic_0001>

<llo_original>
// kernel: tpu_custom_call.1
$region0: #{tpu_custom_call.1}
  #allocation0 [shape = 'u32[]', space=smem, size = 0x4, offset = 0x4, fixed_abs, tag = 'smem constant byte address 0x4 - core index']
  #allocation1 [shape = 'u32[72,128]{1,0:T(1,128)}', space=vmem, size = 0x9000, scoped, tag = 'internal scratch']
  %s0 = inlined_call_operand.hbm [shape: f32[2,4,2,128], index: 0, kind: input, shape index: {}]
  %s1 = inlined_call_operand.hbm [shape: s32[2,2,128], index: 1, kind: input, shape index: {}]
  %s2 = inlined_call_operand.hbm [shape: f32[2,13,2,128], index: 2, kind: output, shape index: {}]
  %s3 = sld [smem:[#allocation0]]
  $region53: #{tpu_custom_call.1} parent=0
    _
  %s5 = ssub.s32 1, %s3
  %s6 = scalar_select 0, %s5, %s3
  $region1: #{tpu_custom_call.1} parent=0
    #allocation2 [shape = 'u8[8192]{0}', space=vmem, size = 0x2000, scoped, tag = 'input window, operand 0']
    #allocation3 [shape = 's32[2]{0}', space=sflag, size = 0x8, scoped, tag = 'scoped memory for tpu_custom_call.1']
    #allocation4 [shape = 's32[2]{0}', space=sflag, size = 0x8, scoped, tag = 'scoped memory for tpu_custom_call.1']
    #allocation5 [shape = 'u8[2048]{0}', space=vmem, size = 0x800, scoped, tag = 'input window, operand 1']
    #allocation6 [shape = 's32[2]{0}', space=sflag, size = 0x8, scoped, tag = 'scoped memory for tpu_custom_call.1']
    #allocation7 [shape = 'u8[26624]{0}', space=vmem, size = 0x6800, scoped, tag = 'output window, operand 0']
    %7 = vsyncpa [#allocation3], 0
    %s8 = scalar_lea.sflag [#allocation3], 1
    %9 = vsyncpa %s8, 0
    %10 = vsyncpa [#allocation6], 0
    %s11 = scalar_lea.sflag [#allocation6], 1
    %12 = vsyncpa %s11, 0
    %13 = vsyncpa [#allocation4], 0
    %s14 = scalar_lea.sflag [#allocation4], 1
    %15 = vsyncpa %s14, 0
    loop: start=0, step=1, limit=4
    $region2: #{tpu_custom_call.1} parent=1 // loop_pre_header
      _
    $region3: #{tpu_custom_call.1} parent=1 // loop_header
      %s17 = sphi 0, %s21
      %p18 = scmp.ge.s32.totalorder %s17, 4
      %s24 = sphi 0, %s43
      %s25 = sphi 0, %s39
      %s26 = sphi 0, %s35
      %s27 = sphi 0, %s24
      %s28 = sphi 0, %s25
      %s29 = sphi 0, %s26
      %s30 = sphi 0, %s27
      %s31 = sphi 0, %s28
      %s32 = sphi 0, %s29
      %s50 = sphi 0, %s52
      %s53 = sphi 0, %s50
      %s54 = sphi 0, %s53
      %s70 = sphi 0, %s54
      %s80 = sphi 0, %s82
      %s83 = sphi 0, %s80
      %s84 = sphi 0, %s83
      %s100 = sphi 0, %s84
      %s108 = sphi 0, %s110
      %s111 = sphi 0, %s108
      %s112 = sphi 0, %s111
      %s128 = sphi 0, %s112
    $region4: #{tpu_custom_call.1} parent=1 // loop_header_branch
      %20 = sbr.rel (%p18) target = $region8
    $region5: #{tpu_custom_call.1} parent=1 // loop_body
      %s22 = ssub.s32 %s17, 1
      %s23 = ssub.s32 %s17, 2
      %s33 = sadd.s32 1, %s26
      %p34 = scmp.ge.s32.totalorder %s33, 1
      %s35 = scalar_select %p34, 0, %s33
      %s36 = sadd.s32 1, %s25
      %s37 = scalar_select %p34, %s36, %s25
      %p38 = scmp.ge.s32.totalorder %s37, 1
      %s39 = scalar_select %p38, 0, %s37
      %s40 = sadd.s32 1, %s24
      %s41 = scalar_select %p38, %s40, %s24
      %p42 = scmp.ge.s32.totalorder %s41, 2
      %s43 = scalar_select %p42, 0, %s41
      %s44 = sadd.s32 %s25, %s26
      %s45 = sadd.s32 %s39, %s35
      %s46 = ssub.s32 %s24, %s43
      %s47 = ssub.s32 %s44, %s45
      %s48 = sor.u32 %s46, %s47
      %p49 = scmp.eq.s32.totalorder %s48, 0
      %s51 = sadd.s32 %s50, 1
      %s52 = scalar_select %p49, %s50, %s51
      %p55 = pneg %p49
      %p56 = scmp.eq.s32.totalorder %s17, 1
      %p57 = por %p55, %p56
      %p58 = scmp.ne.s32.totalorder %s50, %s53
      %p59 = scmp.eq.s32.totalorder %s17, 0
      %p60 = por %p58, %p59
      %p61 = scmp.ne.s32.totalorder %s50, %s53
      %p62 = scmp.eq.s32.totalorder %s22, 1
      %p63 = por %p61, %p62
      %p64 = scmp.ne.s32.totalorder %s53, %s54
      %p65 = scmp.eq.s32.totalorder %s22, 0
      %p66 = por %p64, %p65
      %p67 = scmp.ne.s32.totalorder %s53, %s54
      %p68 = scmp.eq.s32.totalorder %s23, 1
      %p69 = por %p67, %p68
      %p71 = scmp.ne.s32.totalorder %s54, %s70
      %p72 = scmp.eq.s32.totalorder %s23, 0
      %p73 = por %p71, %p72
      %s74 = sadd.s32 %s25, %s26
      %s75 = sadd.s32 %s39, %s35
      %s76 = ssub.s32 %s24, %s43
      %s77 = ssub.s32 %s74, %s75
      %s78 = sor.u32 %s76, %s77
      %p79 = scmp.eq.s32.totalorder %s78, 0
      %s81 = sadd.s32 %s80, 1
      %s82 = scalar_select %p79, %s80, %s81
      %p85 = pneg %p79
      %p86 = scmp.eq.s32.totalorder %s17, 1
      %p87 = por %p85, %p86
      %p88 = scmp.ne.s32.totalorder %s80, %s83
      %p89 = scmp.eq.s32.totalorder %s17, 0
      %p90 = por %p88, %p89
      %p91 = scmp.ne.s32.totalorder %s80, %s83
      %p92 = scmp.eq.s32.totalorder %s22, 1
      %p93 = por %p91, %p92
      %p94 = scmp.ne.s32.totalorder %s83, %s84
      %p95 = scmp.eq.s32.totalorder %s22, 0
      %p96 = por %p94, %p95
      %p97 = scmp.ne.s32.totalorder %s83, %s84
      %p98 = scmp.eq.s32.totalorder %s23, 1
      %p99 = por %p97, %p98
      %p101 = scmp.ne.s32.totalorder %s84, %s100
      %p102 = scmp.eq.s32.totalorder %s23, 0
      %p103 = por %p101, %p102
      %s104 = sadd.s32 %s24, %s25
      %s105 = sadd.s32 %s43, %s39
      %s106 = ssub.s32 %s104, %s105
      %p107 = scmp.eq.s32.totalorder %s106, 0
      %s109 = sadd.s32 %s108, 1
      %s110 = scalar_select %p107, %s108, %s109
      %p113 = pneg %p107
      %p114 = scmp.eq.s32.totalorder %s17, 1
      %p115 = por %p113, %p114
      %p116 = scmp.ne.s32.totalorder %s108, %s111
      %p117 = scmp.eq.s32.totalorder %s17, 0
      %p118 = por %p116, %p117
      %p119 = scmp.ne.s32.totalorder %s108, %s111
      %p120 = scmp.eq.s32.totalorder %s22, 1
      %p121 = por %p119, %p120
      %p122 = scmp.ne.s32.totalorder %s111, %s112
      %p123 = scmp.eq.s32.totalorder %s22, 0
      %p124 = por %p122, %p123
      %p125 = scmp.ne.s32.totalorder %s111, %s112
      %p126 = scmp.eq.s32.totalorder %s23, 1
      %p127 = por %p125, %p126
      %p129 = scmp.ne.s32.totalorder %s112, %s128
      %p130 = scmp.eq.s32.totalorder %s23, 0
      %p131 = por %p129, %p130
      %p132 = scmp.le.s32.totalorder 1, %s17
      %p133 = scmp.lt.s32.totalorder %s17, 3
      %p134 = pnand %p132, %p133
      %p135 = pneg %p134
      // Predicated region
      $region9: #{tpu_custom_call.1} parent=5 // pred_check
        _
      $region10: #{tpu_custom_call.1} parent=5 // pred_check_branch
        %137 = sbr.rel (%p134) target = $region12
      $region11: #{tpu_custom_call.1} parent=5 // pred_region
        %s138 = ssub.s32 %s17, 1
      $region12: #{tpu_custom_call.1} parent=5 // pred_fallthru
        _
      %p139 = scmp.lt.s32.totalorder %s17, 2
      // Predicated region
      $region13: #{tpu_custom_call.1} parent=5 // pred_check
        %p140 = pneg %p139
      $region14: #{tpu_custom_call.1} parent=5 // pred_check_branch
        %142 = sbr.rel (%p140) target = $region16
      $region15: #{tpu_custom_call.1} parent=5 // pred_region
        // Predicated region
        $region17: #{tpu_custom_call.1} parent=15 // pred_check
          %p143 = pneg %p60
        $region18: #{tpu_custom_call.1} parent=15 // pred_check_branch
          %145 = sbr.rel (%p143) target = $region20
        $region19: #{tpu_custom_call.1} parent=15 // pred_region
          %s146 = sand.u32 %s50, 1
          %s147 = scalar_lea.sflag [#allocation3], %s146
          %s148 = sand.u32 %s50, 1
          %s149 = smul.addr %s148, 8
          %s150 = scalar_lea.vmem [#allocation2], %s149
          %s151 = sadd.s32 %s25, %s26
          %153 = vsyncadd %s147, 0
          %s154 = smul.addr %s24, 4
          %s155 = sadd.s32 %s151, %s154
          %s156 = smul.addr %s155, 2
          %s157 = scalar_lea.hbm %s0, %s156
          %s158 = sshll.u32 %s157, 4
          %s159 = int_to_ptr.hbm [resolvable:$true] %s158
          %s160 = sshll.u32 %s150, 4
          %s161 = int_to_ptr.vmem [resolvable:$true] %s160
          %166 = dma.hbm_to_vmem [thread:$0]  %s159, 128, %s161, %s147, 32, 32, 2
        $region20: #{tpu_custom_call.1} parent=15 // pred_fallthru
          _
        // Predicated region
        $region21: #{tpu_custom_call.1} parent=15 // pred_check
          %p167 = pneg %p90
        $region22: #{tpu_custom_call.1} parent=15 // pred_check_branch
          %169 = sbr.rel (%p167) target = $region24
        $region23: #{tpu_custom_call.1} parent=15 // pred_region
          %s170 = sand.u32 %s80, 1
          %s171 = scalar_lea.sflag [#allocation6], %s170
          %s172 = sand.u32 %s80, 1
          %s173 = smul.addr %s172, 2
          %s174 = scalar_lea.vmem [#allocation5], %s173
          %s175 = sadd.s32 %s25, %s26
          %177 = vsyncadd %s171, 0
          %s178 = sadd.s32 %s175, %s24
          %s179 = smul.addr %s178, 2
          %s180 = scalar_lea.hbm %s1, %s179
          %s182 = sshll.u32 %s180, 4
          %s183 = int_to_ptr.hbm [resolvable:$true] %s182
          %s184 = sshll.u32 %s174, 4
          %s185 = int_to_ptr.vmem [resolvable:$true] %s184
          %187 = dma.hbm_to_vmem [thread:$0]  %s183, 32, %s185, %s171
        $region24: #{tpu_custom_call.1} parent=15 // pred_fallthru
          _
      $region16: #{tpu_custom_call.1} parent=5 // pred_fallthru
        _
      %p188 = scmp.le.s32.totalorder 1, %s17
      %p189 = scmp.lt.s32.totalorder %s17, 3
      %p190 = pnand %p188, %p189
      %p191 = pneg %p190
      // Predicated region
      $region25: #{tpu_custom_call.1} parent=5 // pred_check
        _
      $region26: #{tpu_custom_call.1} parent=5 // pred_check_branch
        %193 = sbr.rel (%p190) target = $region28
      $region27: #{tpu_custom_call.1} parent=5 // pred_region
        %s194 = ssub.s32 %s17, 1
        %s195 = sand.u32 %s53, 1
        %s196 = scalar_lea.sflag [#allocation3], %s195
        %s197 = sand.u32 %s53, 1
        %s198 = smul.addr %s197, 8
        %s199 = scalar_lea.vmem [#allocation2], %s198
        // Predicated region
        $region29: #{tpu_custom_call.1} parent=27 // pred_check
          %p200 = pneg %p66
        $region30: #{tpu_custom_call.1} parent=27 // pred_check_branch
          %202 = sbr.rel (%p200) target = $region32
        $region31: #{tpu_custom_call.1} parent=27 // pred_region
          %204 = dma.done %s196, 128
        $region32: #{tpu_custom_call.1} parent=27 // pred_fallthru
          _
        %s205 = sand.u32 %s83, 1
        %s206 = scalar_lea.sflag [#allocation6], %s205
        %s207 = sand.u32 %s83, 1
        %s208 = smul.addr %s207, 2
        %s209 = scalar_lea.vmem [#allocation5], %s208
        // Predicated region
        $region33: #{tpu_custom_call.1} parent=27 // pred_check
          %p210 = pneg %p96
        $region34: #{tpu_custom_call.1} parent=27 // pred_check_branch
          %212 = sbr.rel (%p210) target = $region36
        $region35: #{tpu_custom_call.1} parent=27 // pred_region
          %214 = dma.done %s206, 32
        $region36: #{tpu_custom_call.1} parent=27 // pred_fallthru
          _
        %s215 = sand.u32 %s53, 1
        %s216 = scalar_lea.sflag [#allocation3], %s215
        %s217 = sand.u32 %s53, 1
        %s218 = smul.addr %s217, 8
        %s219 = scalar_lea.vmem [#allocation2], %s218
        %p220 = pneg %p66
        %p221 = pneg %p63
        %s222 = sand.u32 %s83, 1
        %s223 = scalar_lea.sflag [#allocation6], %s222
        %s224 = sand.u32 %s83, 1
        %s225 = smul.addr %s224, 2
        %s226 = scalar_lea.vmem [#allocation5], %s225
        %p227 = pneg %p96
        %p228 = pneg %p93
        %p229 = pneg %p124
        %p230 = pneg %p121
        %s231 = sand.u32 %s111, 1
        %s232 = scalar_lea.sflag [#allocation4], %s231
        %s233 = sand.u32 %s111, 1
        %s234 = smul.addr %s233, 26
        %s235 = scalar_lea.vmem [#allocation7], %s234
        %s236 = sadd.s32 %s28, %s29
        %s237 = sadd.s32 %s28, %s29
        %s238 = sadd.s32 %s27, %s28
        %p239 = scmp.eq.s32.totalorder %s29, 0
        // Predicated region
        $region37: #{tpu_custom_call.1} parent=27 // pred_check
          %p240 = pneg %p239
        $region38: #{tpu_custom_call.1} parent=27 // pred_check_branch
          %242 = sbr.rel (%p240) target = $region40
        $region39: #{tpu_custom_call.1} parent=27 // pred_region
          %243 = vst [vmem:[%s235] sm:$0x3] 0.0
          %244 = vst [vmem:[%s235 + $0x2] sm:$0x3] 0.0
          %245 = vst [vmem:[%s235 + $0x4] sm:$0x3] 0.0
          %246 = vst [vmem:[%s235 + $0x6] sm:$0x3] 0.0
          %247 = vst [vmem:[%s235 + $0x8] sm:$0x3] 0.0
          %248 = vst [vmem:[%s235 + $0xa] sm:$0x3] 0.0
          %249 = vst [vmem:[%s235 + $0xc] sm:$0x3] 0.0
          %250 = vst [vmem:[%s235 + $0xe] sm:$0x3] 0.0
          %251 = vst [vmem:[%s235 + $0x10] sm:$0x3] 0.0
          %252 = vst [vmem:[%s235 + $0x12] sm:$0x3] 0.0
          %253 = vst [vmem:[%s235 + $0x14] sm:$0x3] 0.0
          %254 = vst [vmem:[%s235 + $0x16] sm:$0x3] 0.0
          %255 = vst [vmem:[%s235 + $0x18] sm:$0x3] 0.0
        $region40: #{tpu_custom_call.1} parent=27 // pred_fallthru
          _
        %v256 = vld [vmem:[%s209] sm:$0x3]
        %v257 = vld [vmem:[%s199] sm:$0x3]
        %s258 = scalar_lea.vmem %s199, 2 [#allocation2]
        %v259 = vld [vmem:[%s258] sm:$0x3]
        %s260 = scalar_lea.vmem %s199, 4 [#allocation2]
        %v261 = vld [vmem:[%s260] sm:$0x3]
        %s262 = scalar_lea.vmem %s199, 6 [#allocation2]
        %v263 = vld [vmem:[%s262] sm:$0x3]
        %v264 = vmax.f32 %v257, %v259
        %v265 = vmax.f32 %v264, %v261
        %v266 = vmax.f32 %v265, %v263
        %v267 = vsub.f32 %v257, %v266
        %v268 = vmul.f32 %v267, 1.442695
        %v269 = vpow.pop %v268
        %v270 = vsub.f32 %v259, %v266
        %v271 = vmul.f32 %v270, 1.442695
        %v272 = vpow.pop %v271
        %v273 = vsub.f32 %v261, %v266
        %v274 = vmul.f32 %v273, 1.442695
        %v275 = vpow.pop %v274
        %v276 = vsub.f32 %v263, %v266
        %v277 = vmul.f32 %v276, 1.442695
        %v278 = vpow.pop %v277
        %v279 = vadd.f32 %v269, %v272
        %v280 = vadd.f32 %v279, %v275
        %v281 = vadd.f32 %v280, %v278
        %vm282 = vcmp.eq.s32.totalorder %v256, 0
        %vm283 = vcmp.eq.s32.totalorder %v256, 1
        %vm284 = vcmp.eq.s32.totalorder %v256, 2
        %vm285 = vcmp.eq.s32.totalorder %v256, 3
        %v286 = vsel %vm282, %v257, 0.0
        %v287 = vsel %vm283, %v259, %v286
        %v288 = vsel %vm284, %v261, %v287
        %v289 = vsel %vm285, %v263, %v288
        %v290 = vlog2.pop %v281
        %v291 = vmul.f32 %v290, 0.6931472
        %v292 = vadd.f32 %v291, %v266
        %v293 = vsub.f32 %v292, %v289
        %s294 = scalar_lea.vmem %s235, 24 [#allocation7]
        %v295 = vld [vmem:[%s294] sm:$0x3]
        %v296 = vadd.f32 %v295, %v293
        %297 = vst [vmem:[%s294] sm:$0x3] %v296
        %v298 = vrcp.pop %v281
        %v299 = vmul.f32 %v281, %v298
        %v300 = vsub.f32 2.0, %v299
        %v301 = vmul.f32 %v298, %v300
        %v302 = vmul.f32 %v269, %v301
        %v303 = vsel %vm282, 1, 0
        %v304 = vcvt.s32.f32 %v303
        %v305 = vmul.f32 %v302, %v304
        %v306 = vmul.f32 %v302, %v302
        %v307 = vld [vmem:[%s235] sm:$0x3]
        %v308 = vadd.f32 %v307, %v305
        %309 = vst [vmem:[%s235] sm:$0x3] %v308
        %s310 = scalar_lea.vmem %s235, 8 [#allocation7]
        %v311 = vld [vmem:[%s310] sm:$0x3]
        %v312 = vadd.f32 %v311, %v306
        %313 = vst [vmem:[%s310] sm:$0x3] %v312
        %s314 = scalar_lea.vmem %s235, 16 [#allocation7]
        %v315 = vld [vmem:[%s314] sm:$0x3]
        %v316 = vadd.f32 %v315, %v304
        %317 = vst [vmem:[%s314] sm:$0x3] %v316
        %v318 = vmul.f32 %v272, %v301
        %v319 = vsel %vm283, 1, 0
        %v320 = vcvt.s32.f32 %v319
        %v321 = vmul.f32 %v318, %v320
        %v322 = vmul.f32 %v318, %v318
        %s323 = scalar_lea.vmem %s235, 2 [#allocation7]
        %v324 = vld [vmem:[%s323] sm:$0x3]
        %v325 = vadd.f32 %v324, %v321
        %326 = vst [vmem:[%s323] sm:$0x3] %v325
        %s327 = scalar_lea.vmem %s235, 10 [#allocation7]
        %v328 = vld [vmem:[%s327] sm:$0x3]
        %v329 = vadd.f32 %v328, %v322
        %330 = vst [vmem:[%s327] sm:$0x3] %v329
        %s331 = scalar_lea.vmem %s235, 18 [#allocation7]
        %v332 = vld [vmem:[%s331] sm:$0x3]
        %v333 = vadd.f32 %v332, %v320
        %334 = vst [vmem:[%s331] sm:$0x3] %v333
        %v335 = vmul.f32 %v275, %v301
        %v336 = vsel %vm284, 1, 0
        %v337 = vcvt.s32.f32 %v336
        %v338 = vmul.f32 %v335, %v337
        %v339 = vmul.f32 %v335, %v335
        %s340 = scalar_lea.vmem %s235, 4 [#allocation7]
        %v341 = vld [vmem:[%s340] sm:$0x3]
        %v342 = vadd.f32 %v341, %v338
        %343 = vst [vmem:[%s340] sm:$0x3] %v342
        %s344 = scalar_lea.vmem %s235, 12 [#allocation7]
        %v345 = vld [vmem:[%s344] sm:$0x3]
        %v346 = vadd.f32 %v345, %v339
        %347 = vst [vmem:[%s344] sm:$0x3] %v346
        %s348 = scalar_lea.vmem %s235, 20 [#allocation7]
        %v349 = vld [vmem:[%s348] sm:$0x3]
        %v350 = vadd.f32 %v349, %v337
        %351 = vst [vmem:[%s348] sm:$0x3] %v350
        %v352 = vmul.f32 %v278, %v301
        %v353 = vsel %vm285, 1, 0
        %v354 = vcvt.s32.f32 %v353
        %v355 = vmul.f32 %v352, %v354
        %v356 = vmul.f32 %v352, %v352
        %s357 = scalar_lea.vmem %s235, 6 [#allocation7]
        %v358 = vld [vmem:[%s357] sm:$0x3]
        %v359 = vadd.f32 %v358, %v355
        %360 = vst [vmem:[%s357] sm:$0x3] %v359
        %s361 = scalar_lea.vmem %s235, 14 [#allocation7]
        %v362 = vld [vmem:[%s361] sm:$0x3]
        %v363 = vadd.f32 %v362, %v356
        %364 = vst [vmem:[%s361] sm:$0x3] %v363
        %s365 = scalar_lea.vmem %s235, 22 [#allocation7]
        %v366 = vld [vmem:[%s365] sm:$0x3]
        %v367 = vadd.f32 %v366, %v354
        %368 = vst [vmem:[%s365] sm:$0x3] %v367
        %s369 = sand.u32 %s111, 1
        %s370 = scalar_lea.sflag [#allocation4], %s369
        %s371 = sand.u32 %s111, 1
        %s372 = smul.addr %s371, 26
        %s373 = scalar_lea.vmem [#allocation7], %s372
        // Predicated region
        $region41: #{tpu_custom_call.1} parent=27 // pred_check
          %p374 = pneg %p121
        $region42: #{tpu_custom_call.1} parent=27 // pred_check_branch
          %376 = sbr.rel (%p374) target = $region44
        $region43: #{tpu_custom_call.1} parent=27 // pred_region
          %s377 = sadd.s32 %s27, %s28
          %379 = vsyncadd %s370, 0
          %s380 = smul.addr %s377, 13
          %s381 = smul.addr %s380, 2
          %s382 = scalar_lea.hbm %s2, %s381
          %s383 = sshll.u32 %s373, 4
          %s384 = int_to_ptr.vmem [resolvable:$true] %s383
          %s385 = sshll.u32 %s382, 4
          %s386 = int_to_ptr.hbm [resolvable:$true] %s385
          %391 = dma.vmem_to_hbm [thread:$0]  %s384, 416, %s386, %s370, 32, 32, 2
        $region44: #{tpu_custom_call.1} parent=27 // pred_fallthru
          _
      $region28: #{tpu_custom_call.1} parent=5 // pred_fallthru
        _
      %p392 = scmp.le.s32.totalorder 2, %s17
      // Predicated region
      $region45: #{tpu_custom_call.1} parent=5 // pred_check
        %p393 = pneg %p392
      $region46: #{tpu_custom_call.1} parent=5 // pred_check_branch
        %395 = sbr.rel (%p393) target = $region48
      $region47: #{tpu_custom_call.1} parent=5 // pred_region
        %s396 = ssub.s32 %s17, 2
        // Predicated region
        $region49: #{tpu_custom_call.1} parent=47 // pred_check
          %p397 = pneg %p127
        $region50: #{tpu_custom_call.1} parent=47 // pred_check_branch
          %399 = sbr.rel (%p397) target = $region52
        $region51: #{tpu_custom_call.1} parent=47 // pred_region
          %s400 = sand.u32 %s112, 1
          %s401 = scalar_lea.sflag [#allocation4], %s400
          %s402 = sand.u32 %s112, 1
          %s403 = smul.addr %s402, 26
          %s404 = scalar_lea.vmem [#allocation7], %s403
          %406 = dma.done %s401, 416
        $region52: #{tpu_custom_call.1} parent=47 // pred_fallthru
          _
      $region48: #{tpu_custom_call.1} parent=5 // pred_fallthru
        _
    $region6: #{tpu_custom_call.1} parent=1 // loop_footer
      %s21 = sadd.s32 1, %s17
    $region7: #{tpu_custom_call.1} parent=1 // loop_footer_branch
      %16 = sbr.rel target = $region3
    $region8: #{tpu_custom_call.1} parent=1 // loop_exit
      _
    %407 = vsyncpa [#allocation3], 1
    %s408 = scalar_lea.sflag [#allocation3], 1
    %409 = vsyncpa %s408, 1
    %410 = vsyncpa [#allocation6], 1
    %s411 = scalar_lea.sflag [#allocation6], 1
    %412 = vsyncpa %s411, 1
    %413 = vsyncpa [#allocation4], 1
    %s414 = scalar_lea.sflag [#allocation4], 1
    %415 = vsyncpa %s414, 1

</llo_original>
